<compile_context>
chip_gen: v7x
topology: tpu7x:2x2x1
jax: 0.10.0
libtpu: 0.0.40
codegen_flags: <defaults>
</compile_context>

<pallas_src>
import jax
import jax.numpy as jnp
from jax.experimental import pallas as pl
from jax.experimental.pallas import tpu as pltpu


def _fully1_kernel(w_ref, x_ref, o_ref):
    # w_ref: (N, B)  full weight (resident; constant index_map -> not re-DMA'd)
    # x_ref: (B, TF) tile of the flattened input (lane-dense along F)
    # o_ref: (N, TF) output tile (lane-dense along F)
    w = w_ref[...].astype(jnp.float32)   # (N, B)
    x = x_ref[...].astype(jnp.float32)   # (B, TF)
    b = x.shape[0]
    # Tiny contraction (B=2) on the VPU: out[n, f] = sum_k w[n, k] * x[k, f].
    acc = w[:, 0:1] * x[0:1, :]
    for k in range(1, b):
        acc = acc + w[:, k : k + 1] * x[k : k + 1, :]
    o_ref[...] = acc.astype(o_ref.dtype)


def fully1net_forward(x, adj_hat, weight, *, tf=512):
    """x: (B, C, H, W) NCHW, weight: (out_features=N, in_features=B).

    Returns (C*H*W, N), matching Linear(B, N, bias=False)(x.view(B, -1).T).
    adj_hat is accepted for signature parity but unused (as in the PyTorch module).
    """
    del adj_hat  # unused in the reference forward pass

    B = x.shape[0]
    x_flat = x.reshape(B, -1)            # (B, F) — contiguous, no transpose needed
    F_rows = x_flat.shape[1]
    N = weight.shape[0]

    # Tile the F axis: lane-dense (multiple of 128), capped so small F -> 1 step.
    tf = min(tf, pl.cdiv(F_rows, 128) * 128)
    f_pad = pl.cdiv(F_rows, tf) * tf
    if f_pad != F_rows:
        x_flat = jnp.pad(x_flat, ((0, 0), (0, f_pad - F_rows)))

    grid = (f_pad // tf,)

    cost = pl.CostEstimate(
        flops=2 * f_pad * B * N,
        transcendentals=0,
        bytes_accessed=4 * (B * f_pad + N * B + N * f_pad),
    )

    y_t = pl.pallas_call(
        _fully1_kernel,
        out_shape=jax.ShapeDtypeStruct((N, f_pad), x.dtype),
        grid_spec=pl.GridSpec(
            grid=grid,
            in_specs=[
                pl.BlockSpec((N, B), lambda i: (0, 0)),    # weight, invariant
                pl.BlockSpec((B, tf), lambda i: (0, i)),   # x tile, lane-dense F
            ],
            out_specs=pl.BlockSpec((N, tf), lambda i: (0, i)),
        ),
        compiler_params=pltpu.CompilerParams(
            dimension_semantics=("parallel",),
        ),
        cost_estimate=cost,
    )(weight, x_flat)

    # Layout plumbing only: slice off padding and flip (N, F) -> (F, N).
    return y_t[:, :F_rows].T


if __name__ == "__main__":
    key = jax.random.PRNGKey(0)
    kx, ka, kw = jax.random.split(key, 3)

    # Small shapes consistent with the module:
    #   x: (B=2, C=4, H=16, W=16)  ->  flattened F = 4*16*16 = 1024
    #   Linear(in_features=B=2, out_features=8, bias=False)
    B, C, H, W = 2, 4, 16, 16
    in_features = B           # Linear is applied along the batch axis after the transpose
    out_features = 8

    x = jax.random.normal(kx, (B, C, H, W), dtype=jnp.float32)
    adj_hat = jax.random.normal(ka, (8, 8), dtype=jnp.float32)  # unused by forward
    weight = jax.random.normal(kw, (out_features, in_features), dtype=jnp.float32) * 0.1

    y = fully1net_forward(x, adj_hat, weight)
    y = jax.block_until_ready(y)

    # Reference check against plain JAX (same math as the PyTorch forward).
    y_ref = jnp.dot(x.reshape(B, -1).T, weight.T)
    assert y.shape == (C * H * W, out_features)
    assert jnp.allclose(y, y_ref, atol=1e-5, rtol=1e-5)

    print("KERNEL_OK")
</pallas_src>

<mosaic_0001>
module attributes {stable_mosaic.version = 11 : i64} {
  func.func @_fully1_kernel(%arg0: i32, %arg1: memref<8x2xf32, #tpu.memory_space<vmem>>, %arg2: memref<2x512xf32, #tpu.memory_space<vmem>>, %arg3: memref<8x512xf32, #tpu.memory_space<vmem>>) attributes {dimension_semantics = [#tpu.dimension_semantics<parallel>], iteration_bounds = array<i64: 2>, scalar_prefetch = 0 : i64, scratch_operands = 0 : i64, tpu.core_type = #tpu.core_type<tc>, window_params = [{pipeline_mode = #tpu.pipeline_mode<synchronous>, transform_indices = @transform_0, window_bounds = array<i64: 8, 2>}, {transform_indices = @transform_1, window_bounds = array<i64: 2, 512>}, {transform_indices = @transform_2, window_bounds = array<i64: 8, 512>}]} {
    %c0 = arith.constant 0 : index
    %c0_0 = arith.constant 0 : index
    %0 = vector.load %arg1[%c0, %c0_0] : memref<8x2xf32, #tpu.memory_space<vmem>>, vector<8x2xf32>
    %c0_1 = arith.constant 0 : index
    %c0_2 = arith.constant 0 : index
    %1 = vector.load %arg2[%c0_1, %c0_2] : memref<2x512xf32, #tpu.memory_space<vmem>>, vector<2x512xf32>
    %2 = vector.extract_strided_slice %0 {offsets = [0, 0], sizes = [8, 1], strides = [1, 1]} : vector<8x2xf32> to vector<8x1xf32>
    %3 = vector.extract_strided_slice %1 {offsets = [0, 0], sizes = [1, 512], strides = [1, 1]} : vector<2x512xf32> to vector<1x512xf32>
    %4 = vector.broadcast %2 : vector<8x1xf32> to vector<8x512xf32>
    %5 = vector.broadcast %3 : vector<1x512xf32> to vector<8x512xf32>
    %6 = arith.mulf %4, %5 : vector<8x512xf32>
    %7 = vector.extract_strided_slice %0 {offsets = [0, 1], sizes = [8, 1], strides = [1, 1]} : vector<8x2xf32> to vector<8x1xf32>
    %8 = vector.extract_strided_slice %1 {offsets = [1, 0], sizes = [1, 512], strides = [1, 1]} : vector<2x512xf32> to vector<1x512xf32>
    %9 = vector.broadcast %7 : vector<8x1xf32> to vector<8x512xf32>
    %10 = vector.broadcast %8 : vector<1x512xf32> to vector<8x512xf32>
    %11 = arith.mulf %9, %10 : vector<8x512xf32>
    %12 = arith.addf %6, %11 : vector<8x512xf32>
    %c0_3 = arith.constant 0 : index
    %c0_4 = arith.constant 0 : index
    %13 = vector.load %arg3[%c0_3, %c0_4] : memref<8x512xf32, #tpu.memory_space<vmem>>, vector<8x512xf32>
    tpu.vector_store %arg3[%c0_3, %c0_4], %12 {strides = array<i32>} : memref<8x512xf32, #tpu.memory_space<vmem>>, vector<8x512xf32>,
    return
  }
  func.func @transform_0(%arg0: i32) -> (i32, i32) {
    %c0_i32 = arith.constant 0 : i32
    %c0_i32_0 = arith.constant 0 : i32
    %c0_i32_1 = arith.constant 0 : i32
    return %c0_i32, %c0_i32_0 : i32, i32
  }
  func.func @transform_1(%arg0: i32) -> (i32, i32) {
    %c0_i32 = arith.constant 0 : i32
    %c0_i32_0 = arith.constant 0 : i32
    return %c0_i32, %arg0 : i32, i32
  }
  func.func @transform_2(%arg0: i32) -> (i32, i32) {
    %c0_i32 = arith.constant 0 : i32
    %c0_i32_0 = arith.constant 0 : i32
    return %c0_i32, %arg0 : i32, i32
  }
}

</mosaic_0001>

<llo_original>
// kernel: tpu_custom_call.1
$region0: #{tpu_custom_call.1}
  #allocation0 [shape = 'u32[]', space=smem, size = 0x4, offset = 0x4, fixed_abs, tag = 'smem constant byte address 0x4 - core index']
  #allocation1 [shape = 'u32[144,128]{1,0:T(1,128)}', space=vmem, size = 0x12000, scoped, tag = 'internal scratch']
  %s0 = inlined_call_operand.vmem [shape: f32[8,2], index: 0, kind: input, shape index: {}]
  %s1 = inlined_call_operand.hbm [shape: f32[2,1024], index: 1, kind: input, shape index: {}]
  %s2 = inlined_call_operand.hbm [shape: f32[8,1024], index: 2, kind: output, shape index: {}]
  %s3 = sld [smem:[#allocation0]]
  $region45: #{tpu_custom_call.1} parent=0
    _
  %s5 = ssub.s32 1, %s3
  %s6 = scalar_select 0, %s5, %s3
  $region1: #{tpu_custom_call.1} parent=0
    #allocation2 [shape = 'u8[8192]{0}', space=vmem, size = 0x2000, scoped, tag = 'input window, operand 1']
    #allocation3 [shape = 's32[2]{0}', space=sflag, size = 0x8, scoped, tag = 'scoped memory for tpu_custom_call.1']
    #allocation4 [shape = 's32[2]{0}', space=sflag, size = 0x8, scoped, tag = 'scoped memory for tpu_custom_call.1']
    #allocation5 [shape = 'u8[32768]{0}', space=vmem, size = 0x8000, scoped, tag = 'output window, operand 0']
    %7 = vsyncpa [#allocation3], 0
    %s8 = scalar_lea.sflag [#allocation3], 1
    %9 = vsyncpa %s8, 0
    %10 = vsyncpa [#allocation4], 0
    %s11 = scalar_lea.sflag [#allocation4], 1
    %12 = vsyncpa %s11, 0
    loop: start=0, step=1, limit=4
    $region2: #{tpu_custom_call.1} parent=1 // loop_pre_header
      _
    $region3: #{tpu_custom_call.1} parent=1 // loop_header
      %s14 = sphi 0, %s18
      %p15 = scmp.ge.s32.totalorder %s14, 4
      %s22 = sphi 0, %s22
      %s24 = sphi 0, %s22
      %s25 = sphi 0, %s24
      %s39 = sphi 0, %s25
      %s45 = sphi 0, %s47
      %s48 = sphi 0, %s45
      %s49 = sphi 0, %s48
      %s65 = sphi 0, %s49
      %s71 = sphi 0, %s73
      %s74 = sphi 0, %s71
      %s75 = sphi 0, %s74
      %s91 = sphi 0, %s75
    $region4: #{tpu_custom_call.1} parent=1 // loop_header_branch
      %17 = sbr.rel (%p15) target = $region8
    $region5: #{tpu_custom_call.1} parent=1 // loop_body
      %s19 = ssub.s32 %s14, 1
      %s20 = ssub.s32 %s14, 2
      %s21 = sadd.s32 %s14, 1
      %s23 = sadd.s32 %s22, 1
      %p26 = scmp.eq.s32.totalorder %s14, 1
      %p27 = scmp.ne.s32.totalorder %s22, %s24
      %p28 = scmp.eq.s32.totalorder %s14, 0
      %p29 = por %p27, %p28
      %p30 = scmp.ne.s32.totalorder %s22, %s24
      %p31 = scmp.eq.s32.totalorder %s19, 1
      %p32 = por %p30, %p31
      %p33 = scmp.ne.s32.totalorder %s24, %s25
      %p34 = scmp.eq.s32.totalorder %s19, 0
      %p35 = por %p33, %p34
      %p36 = scmp.ne.s32.totalorder %s24, %s25
      %p37 = scmp.eq.s32.totalorder %s20, 1
      %p38 = por %p36, %p37
      %p40 = scmp.ne.s32.totalorder %s25, %s39
      %p41 = scmp.eq.s32.totalorder %s20, 0
      %p42 = por %p40, %p41
      %s43 = ssub.s32 %s14, %s21
      %p44 = scmp.eq.s32.totalorder %s43, 0
      %s46 = sadd.s32 %s45, 1
      %s47 = scalar_select %p44, %s45, %s46
      %p50 = pneg %p44
      %p51 = scmp.eq.s32.totalorder %s14, 1
      %p52 = por %p50, %p51
      %p53 = scmp.ne.s32.totalorder %s45, %s48
      %p54 = scmp.eq.s32.totalorder %s14, 0
      %p55 = por %p53, %p54
      %p56 = scmp.ne.s32.totalorder %s45, %s48
      %p57 = scmp.eq.s32.totalorder %s19, 1
      %p58 = por %p56, %p57
      %p59 = scmp.ne.s32.totalorder %s48, %s49
      %p60 = scmp.eq.s32.totalorder %s19, 0
      %p61 = por %p59, %p60
      %p62 = scmp.ne.s32.totalorder %s48, %s49
      %p63 = scmp.eq.s32.totalorder %s20, 1
      %p64 = por %p62, %p63
      %p66 = scmp.ne.s32.totalorder %s49, %s65
      %p67 = scmp.eq.s32.totalorder %s20, 0
      %p68 = por %p66, %p67
      %s69 = ssub.s32 %s14, %s21
      %p70 = scmp.eq.s32.totalorder %s69, 0
      %s72 = sadd.s32 %s71, 1
      %s73 = scalar_select %p70, %s71, %s72
      %p76 = pneg %p70
      %p77 = scmp.eq.s32.totalorder %s14, 1
      %p78 = por %p76, %p77
      %p79 = scmp.ne.s32.totalorder %s71, %s74
      %p80 = scmp.eq.s32.totalorder %s14, 0
      %p81 = por %p79, %p80
      %p82 = scmp.ne.s32.totalorder %s71, %s74
      %p83 = scmp.eq.s32.totalorder %s19, 1
      %p84 = por %p82, %p83
      %p85 = scmp.ne.s32.totalorder %s74, %s75
      %p86 = scmp.eq.s32.totalorder %s19, 0
      %p87 = por %p85, %p86
      %p88 = scmp.ne.s32.totalorder %s74, %s75
      %p89 = scmp.eq.s32.totalorder %s20, 1
      %p90 = por %p88, %p89
      %p92 = scmp.ne.s32.totalorder %s75, %s91
      %p93 = scmp.eq.s32.totalorder %s20, 0
      %p94 = por %p92, %p93
      %p95 = scmp.le.s32.totalorder 1, %s14
      %p96 = scmp.lt.s32.totalorder %s14, 3
      %p97 = pnand %p95, %p96
      %p98 = pneg %p97
      // Predicated region
      $region9: #{tpu_custom_call.1} parent=5 // pred_check
        _
      $region10: #{tpu_custom_call.1} parent=5 // pred_check_branch
        %100 = sbr.rel (%p97) target = $region12
      $region11: #{tpu_custom_call.1} parent=5 // pred_region
        %s101 = ssub.s32 %s14, 1
        // Predicated region
        $region13: #{tpu_custom_call.1} parent=11 // pred_check
          %p102 = pneg %p35
        $region14: #{tpu_custom_call.1} parent=11 // pred_check_branch
          %104 = sbr.rel (%p102) target = $region16
        $region15: #{tpu_custom_call.1} parent=11 // pred_region
          _
        $region16: #{tpu_custom_call.1} parent=11 // pred_fallthru
          _
      $region12: #{tpu_custom_call.1} parent=5 // pred_fallthru
        _
      %p105 = scmp.lt.s32.totalorder %s14, 2
      // Predicated region
      $region17: #{tpu_custom_call.1} parent=5 // pred_check
        %p106 = pneg %p105
      $region18: #{tpu_custom_call.1} parent=5 // pred_check_branch
        %108 = sbr.rel (%p106) target = $region20
      $region19: #{tpu_custom_call.1} parent=5 // pred_region
        // Predicated region
        $region21: #{tpu_custom_call.1} parent=19 // pred_check
          %p109 = pneg %p55
        $region22: #{tpu_custom_call.1} parent=19 // pred_check_branch
          %111 = sbr.rel (%p109) target = $region24
        $region23: #{tpu_custom_call.1} parent=19 // pred_region
          %s112 = sand.u32 %s45, 1
          %s113 = scalar_lea.sflag [#allocation3], %s112
          %s114 = sand.u32 %s45, 1
          %s115 = smul.addr %s114, 8
          %s116 = scalar_lea.vmem [#allocation2], %s115
          %s117 = smul.u32 4, %s14
          %s119 = ssub.s32 128, 128
          %120 = vsyncadd %s113, %s119
          %s121 = smul.addr %s117, 32
          %s122 = scalar_lea.hbm %s1, %s121
          %s124 = sshll.u32 %s116, 4
          %s125 = int_to_ptr.vmem [resolvable:$true] %s124
          %127 = dma.hbm_to_vmem [thread:$0]  %s122, 128, %s125, %s113
        $region24: #{tpu_custom_call.1} parent=19 // pred_fallthru
          _
      $region20: #{tpu_custom_call.1} parent=5 // pred_fallthru
        _
      %p128 = scmp.le.s32.totalorder 1, %s14
      %p129 = scmp.lt.s32.totalorder %s14, 3
      %p130 = pnand %p128, %p129
      %p131 = pneg %p130
      // Predicated region
      $region25: #{tpu_custom_call.1} parent=5 // pred_check
        _
      $region26: #{tpu_custom_call.1} parent=5 // pred_check_branch
        %133 = sbr.rel (%p130) target = $region28
      $region27: #{tpu_custom_call.1} parent=5 // pred_region
        %s134 = ssub.s32 %s14, 1
        %s135 = sand.u32 %s48, 1
        %s136 = scalar_lea.sflag [#allocation3], %s135
        %s137 = sand.u32 %s48, 1
        %s138 = smul.addr %s137, 8
        %s139 = scalar_lea.vmem [#allocation2], %s138
        // Predicated region
        $region29: #{tpu_custom_call.1} parent=27 // pred_check
          %p140 = pneg %p61
        $region30: #{tpu_custom_call.1} parent=27 // pred_check_branch
          %142 = sbr.rel (%p140) target = $region32
        $region31: #{tpu_custom_call.1} parent=27 // pred_region
          %143 = dma.done %s136, 128
        $region32: #{tpu_custom_call.1} parent=27 // pred_fallthru
          _
        %p144 = pneg %p35
        %p145 = pneg %p32
        %s146 = sand.u32 %s48, 1
        %s147 = scalar_lea.sflag [#allocation3], %s146
        %s148 = sand.u32 %s48, 1
        %s149 = smul.addr %s148, 8
        %s150 = scalar_lea.vmem [#allocation2], %s149
        %p151 = pneg %p61
        %p152 = pneg %p58
        %p153 = pneg %p87
        %p154 = pneg %p84
        %s155 = sand.u32 %s74, 1
        %s156 = scalar_lea.sflag [#allocation4], %s155
        %s157 = sand.u32 %s74, 1
        %s158 = smul.addr %s157, 32
        %s159 = scalar_lea.vmem [#allocation5], %s158
        %s160 = smul.u32 4, %s19
        %s161 = smul.u32 4, %s19
        %v162 = vld [vmem:[%s0] sm:$0xff]
        %v163 = vld [vmem:[%s139] sm:$0xff]
        %165 = vset.pattern.permute.xlu0 0
        %166 = vperm.xlu0 %165, %v162
        %v167 = vpop.permute.xlu0 %166
        %v170 = vlaneseq
        %v171 = vshrl.u32 %v170, 7
        %v172 = vsub.s32 0, %v171
        %v173 = vrot.slane %v163, %v172
        %v174 = vlaneseq
        %v175 = vshrl.u32 %v174, 7
        %v176 = vsub.s32 2, %v175
        %v177 = vrot.slane %v163, %v176
        %v178 = vlaneseq
        %v179 = vshrl.u32 %v178, 7
        %v180 = vsub.s32 4, %v179
        %v181 = vrot.slane %v163, %v180
        %v182 = vlaneseq
        %v183 = vshrl.u32 %v182, 7
        %v184 = vsub.s32 6, %v183
        %v185 = vrot.slane %v163, %v184
        %v190 = vlaneseq
        %v191 = vshrl.u32 %v190, 7
        %v192 = vsub.s32 0, %v191
        %v193 = vrot.slane %v173, %v192
        %v194 = vlaneseq
        %v195 = vshrl.u32 %v194, 7
        %v196 = vsub.s32 0, %v195
        %v197 = vrot.slane %v177, %v196
        %v198 = vlaneseq
        %v199 = vshrl.u32 %v198, 7
        %v200 = vsub.s32 0, %v199
        %v201 = vrot.slane %v181, %v200
        %v202 = vlaneseq
        %v203 = vshrl.u32 %v202, 7
        %v204 = vsub.s32 0, %v203
        %v205 = vrot.slane %v185, %v204
        %v206 = vmul.f32 %v167, %v193
        %v207 = vmul.f32 %v167, %v197
        %v208 = vmul.f32 %v167, %v201
        %v209 = vmul.f32 %v167, %v205
        %210 = vset.pattern.permute.xlu0 1
        %211 = vperm.xlu0 %210, %v162
        %v212 = vpop.permute.xlu0 %211
        %v214 = vlaneseq
        %v215 = vshrl.u32 %v214, 7
        %v216 = vsub.s32 1, %v215
        %v217 = vrot.slane %v163, %v216
        %v218 = vlaneseq
        %v219 = vshrl.u32 %v218, 7
        %v220 = vsub.s32 3, %v219
        %v221 = vrot.slane %v163, %v220
        %v222 = vlaneseq
        %v223 = vshrl.u32 %v222, 7
        %v224 = vsub.s32 5, %v223
        %v225 = vrot.slane %v163, %v224
        %v226 = vlaneseq
        %v227 = vshrl.u32 %v226, 7
        %v228 = vsub.s32 7, %v227
        %v229 = vrot.slane %v163, %v228
        %v234 = vlaneseq
        %v235 = vshrl.u32 %v234, 7
        %v236 = vsub.s32 1, %v235
        %v237 = vrot.slane %v217, %v236
        %v238 = vlaneseq
        %v239 = vshrl.u32 %v238, 7
        %v240 = vsub.s32 1, %v239
        %v241 = vrot.slane %v221, %v240
        %v242 = vlaneseq
        %v243 = vshrl.u32 %v242, 7
        %v244 = vsub.s32 1, %v243
        %v245 = vrot.slane %v225, %v244
        %v246 = vlaneseq
        %v247 = vshrl.u32 %v246, 7
        %v248 = vsub.s32 1, %v247
        %v249 = vrot.slane %v229, %v248
        %v250 = vmul.f32 %v212, %v237
        %v251 = vmul.f32 %v212, %v241
        %v252 = vmul.f32 %v212, %v245
        %v253 = vmul.f32 %v212, %v249
        %v254 = vadd.f32 %v206, %v250
        %v255 = vadd.f32 %v207, %v251
        %v256 = vadd.f32 %v208, %v252
        %v257 = vadd.f32 %v209, %v253
        %258 = vst [vmem:[%s159] sm:$0xff] %v254
        %259 = vst [vmem:[%s159 + $0x8] sm:$0xff] %v255
        %260 = vst [vmem:[%s159 + $0x10] sm:$0xff] %v256
        %261 = vst [vmem:[%s159 + $0x18] sm:$0xff] %v257
        %s262 = sand.u32 %s74, 1
        %s263 = scalar_lea.sflag [#allocation4], %s262
        %s264 = sand.u32 %s74, 1
        %s265 = smul.addr %s264, 32
        %s266 = scalar_lea.vmem [#allocation5], %s265
        // Predicated region
        $region33: #{tpu_custom_call.1} parent=27 // pred_check
          %p267 = pneg %p84
        $region34: #{tpu_custom_call.1} parent=27 // pred_check_branch
          %269 = sbr.rel (%p267) target = $region36
        $region35: #{tpu_custom_call.1} parent=27 // pred_region
          %s270 = smul.u32 4, %s19
          %s272 = ssub.s32 512, 512
          %273 = vsyncadd %s263, %s272
          %s274 = smul.addr %s270, 128
          %s275 = scalar_lea.hbm %s2, %s274
          %s277 = sshll.u32 %s266, 4
          %s278 = int_to_ptr.vmem [resolvable:$true] %s277
          %280 = dma.vmem_to_hbm [thread:$0]  %s278, 512, %s275, %s263
        $region36: #{tpu_custom_call.1} parent=27 // pred_fallthru
          _
      $region28: #{tpu_custom_call.1} parent=5 // pred_fallthru
        _
      %p281 = scmp.le.s32.totalorder 2, %s14
      // Predicated region
      $region37: #{tpu_custom_call.1} parent=5 // pred_check
        %p282 = pneg %p281
      $region38: #{tpu_custom_call.1} parent=5 // pred_check_branch
        %284 = sbr.rel (%p282) target = $region40
      $region39: #{tpu_custom_call.1} parent=5 // pred_region
        %s285 = ssub.s32 %s14, 2
        // Predicated region
        $region41: #{tpu_custom_call.1} parent=39 // pred_check
          %p286 = pneg %p90
        $region42: #{tpu_custom_call.1} parent=39 // pred_check_branch
          %288 = sbr.rel (%p286) target = $region44
        $region43: #{tpu_custom_call.1} parent=39 // pred_region
          %s289 = sand.u32 %s75, 1
          %s290 = scalar_lea.sflag [#allocation4], %s289
          %s291 = sand.u32 %s75, 1
          %s292 = smul.addr %s291, 32
          %s293 = scalar_lea.vmem [#allocation5], %s292
          %294 = dma.done %s290, 512
        $region44: #{tpu_custom_call.1} parent=39 // pred_fallthru
          _
      $region40: #{tpu_custom_call.1} parent=5 // pred_fallthru
        _
    $region6: #{tpu_custom_call.1} parent=1 // loop_footer
      %s18 = sadd.s32 1, %s14
    $region7: #{tpu_custom_call.1} parent=1 // loop_footer_branch
      %13 = sbr.rel target = $region3
    $region8: #{tpu_custom_call.1} parent=1 // loop_exit
      _
    %295 = vsyncpa [#allocation3], 1
    %s296 = scalar_lea.sflag [#allocation3], 1
    %297 = vsyncpa %s296, 1
    %298 = vsyncpa [#allocation4], 1
    %s299 = scalar_lea.sflag [#allocation4], 1
    %300 = vsyncpa %s299, 1

</llo_original>
